<compile_context>
chip_gen: v6e
topology: v6e:2x2x1
jax: 0.10.0
libtpu: 0.0.40
codegen_flags: <defaults>
</compile_context>

<pallas_src>
import functools

import jax
import jax.numpy as jnp
from jax.experimental import pallas as pl
from jax.experimental.pallas import tpu as pltpu

LEAKY_SLOPE = 0.01  # PyTorch F.leaky_relu default negative_slope
HIDDEN = 64         # fc1 width (= 32 + 32)
OUT_PAD = 128       # lane-dense padded output width


def _leaky_relu(x):
    return jnp.where(x > 0, x, LEAKY_SLOPE * x)


def _round_up(x, m):
    return ((x + m - 1) // m) * m


def _default_batch_tile():
    """128-row tiles on v5e (128x128 MXU, 1 vst slot), 256 on v6e/v7x."""
    try:
        kind = jax.devices()[0].device_kind.lower()
        if "v5 lite" in kind or "v5e" in kind or "v5litepod" in kind:
            return 128
    except Exception:
        pass
    return 256


# --------------------------------------------------------------------------
# Kernel
# --------------------------------------------------------------------------
def qnetwork_kernel(x_ref, w_in_ref, b_in_ref, w1_ref, b1_ref,
                    wo_ref, bo_ref, out_ref):
    # h = leaky_relu([s, a] @ blockdiag(Ws, Wa) + [bs, ba])   -> [TB, 64]
    h = _leaky_relu(
        jnp.dot(x_ref[...], w_in_ref[...], preferred_element_type=jnp.float32)
        + b_in_ref[...])
    # x = leaky_relu(h @ W1 + b1)                              -> [TB, 64]
    x = _leaky_relu(
        jnp.dot(h, w1_ref[...], preferred_element_type=jnp.float32)
        + b1_ref[...])
    # q_pad = x @ Wo_pad + bo_pad                              -> [TB, 128] (lane-dense)
    out_ref[...] = (
        jnp.dot(x, wo_ref[...], preferred_element_type=jnp.float32)
        + bo_ref[...]).astype(out_ref.dtype)


# --------------------------------------------------------------------------
# One-time parameter packing (hoisted out of the per-call path)
# --------------------------------------------------------------------------
def pack_params(params):
    """Transpose / block-diag / pad PyTorch-layout weights once.

    Returns a dict of ARRAYS ONLY (safe to pass through jit)."""
    state_dim = params["Ws"].shape[1]
    action_dim = params["Wa"].shape[1]
    d_in = state_dim + action_dim

    # Block-diagonal fused first layer: [d_in, 64]
    w_in = jnp.zeros((d_in, HIDDEN), jnp.float32)
    w_in = w_in.at[:state_dim, :32].set(params["Ws"].T)
    w_in = w_in.at[state_dim:, 32:].set(params["Wa"].T)
    b_in = jnp.concatenate([params["bs"], params["ba"]]).reshape(1, HIDDEN)
    b_in = b_in.astype(jnp.float32)

    w1 = params["W1"].T.astype(jnp.float32)            # [64, 64]
    b1 = params["b1"].reshape(1, HIDDEN).astype(jnp.float32)

    # Lane-dense padded output layer: [64, 128], [1, 128]
    wo = jnp.zeros((HIDDEN, OUT_PAD), jnp.float32)
    wo = wo.at[:, :action_dim].set(params["Wo"].T)
    bo = jnp.zeros((1, OUT_PAD), jnp.float32)
    bo = bo.at[:, :action_dim].set(params["bo"])

    return {"w_in": w_in, "b_in": b_in, "w1": w1, "b1": b1, "wo": wo, "bo": bo}


# --------------------------------------------------------------------------
# Forward
# --------------------------------------------------------------------------
@functools.partial(jax.jit, static_argnames=("action_dim", "tb_max"))
def qnetwork_forward(s, a, packed, *, action_dim, tb_max=None):
    """Pallas forward. s: [B, state_dim], a: [B, action_dim] -> [B, action_dim]."""
    if tb_max is None:
        tb_max = _default_batch_tile()

    B = s.shape[0]
    d_in = packed["w_in"].shape[0]

    # Single fused input stream for the block-diagonal first layer.
    x_in = jnp.concatenate([s, a], axis=-1).astype(jnp.float32)  # [B, d_in]

    # Batch tile: multiple of 8 (sublane), capped at tb_max; pad ragged tail.
    tb = min(tb_max, _round_up(B, 8))
    b_pad = _round_up(B, tb)
    if b_pad != B:
        x_in = jnp.pad(x_in, ((0, b_pad - B), (0, 0)))

    grid = (b_pad // tb,)

    def _const(i):
        return (0, 0)

    out_pad = pl.pallas_call(
        qnetwork_kernel,
        out_shape=jax.ShapeDtypeStruct((b_pad, OUT_PAD), jnp.float32),
        grid=grid,
        in_specs=[
            pl.BlockSpec((tb, d_in), lambda i: (i, 0)),        # activations (tiled)
            pl.BlockSpec((d_in, HIDDEN), _const),              # w_in (resident)
            pl.BlockSpec((1, HIDDEN), _const),                 # b_in
            pl.BlockSpec((HIDDEN, HIDDEN), _const),            # w1
            pl.BlockSpec((1, HIDDEN), _const),                 # b1
            pl.BlockSpec((HIDDEN, OUT_PAD), _const),           # wo (padded)
            pl.BlockSpec((1, OUT_PAD), _const),                # bo (padded)
        ],
        out_specs=pl.BlockSpec((tb, OUT_PAD), lambda i: (i, 0)),
        compiler_params=pltpu.CompilerParams(
            dimension_semantics=("parallel",)),
    )(x_in, packed["w_in"], packed["b_in"], packed["w1"], packed["b1"],
      packed["wo"], packed["bo"])

    # Static slice: B and action_dim are Python ints at trace time.
    return out_pad[:B, :action_dim]


# --------------------------------------------------------------------------
# Pure-JAX reference mirroring the PyTorch module
# --------------------------------------------------------------------------
def qnetwork_reference(s, a, params):
    h1 = jax.nn.leaky_relu(s @ params["Ws"].T + params["bs"], LEAKY_SLOPE)
    h2 = jax.nn.leaky_relu(a @ params["Wa"].T + params["ba"], LEAKY_SLOPE)
    x = jnp.concatenate([h1, h2], axis=-1)
    x = jax.nn.leaky_relu(x @ params["W1"].T + params["b1"], LEAKY_SLOPE)
    return x @ params["Wo"].T + params["bo"]


def init_params(key, state_dim, action_dim):
    """Deterministic init with PyTorch Linear shapes: W is (out, in)."""
    ks = jax.random.split(key, 8)

    def u(k, shape, fan_in):
        bound = 1.0 / jnp.sqrt(fan_in)
        return jax.random.uniform(k, shape, jnp.float32, -bound, bound)

    return {
        "Ws": u(ks[0], (32, state_dim), state_dim),
        "bs": u(ks[1], (32,), state_dim),
        "Wa": u(ks[2], (32, action_dim), action_dim),
        "ba": u(ks[3], (32,), action_dim),
        "W1": u(ks[4], (64, 64), 64),
        "b1": u(ks[5], (64,), 64),
        "Wo": u(ks[6], (action_dim, 64), 64),
        "bo": u(ks[7], (action_dim,), 64),
    }


if __name__ == "__main__":
    STATE_DIM, ACTION_DIM = 16, 4

    key = jax.random.PRNGKey(0)
    k_s, k_a, k_p, k_s2, k_a2 = jax.random.split(key, 5)
    params = init_params(k_p, STATE_DIM, ACTION_DIM)
    packed = pack_params(params)  # one-time layout work, outside the hot loop

    # Small batch (single tile, no padding path).
    B1 = 8
    s1 = jax.random.normal(k_s, (B1, STATE_DIM), jnp.float32)
    a1 = jax.random.normal(k_a, (B1, ACTION_DIM), jnp.float32)
    q1 = jax.block_until_ready(
        qnetwork_forward(s1, a1, packed, action_dim=ACTION_DIM))
    r1 = jax.block_until_ready(qnetwork_reference(s1, a1, params))
    assert q1.shape == (B1, ACTION_DIM)
    assert jnp.allclose(q1, r1, atol=1e-5, rtol=1e-5), "mismatch (B=8)"

    # Larger / ragged batch (exercises batch grid + tail padding).
    B2 = 300
    s2 = jax.random.normal(k_s2, (B2, STATE_DIM), jnp.float32)
    a2 = jax.random.normal(k_a2, (B2, ACTION_DIM), jnp.float32)
    q2 = jax.block_until_ready(
        qnetwork_forward(s2, a2, packed, action_dim=ACTION_DIM))
    r2 = jax.block_until_ready(qnetwork_reference(s2, a2, params))
    assert q2.shape == (B2, ACTION_DIM)
    assert jnp.allclose(q2, r2, atol=1e-5, rtol=1e-5), "mismatch (B=300)"

    print("KERNEL_OK")
</pallas_src>

<mosaic_0001>
module attributes {stable_mosaic.version = 11 : i64} {
  func.func @qnetwork_kernel(%arg0: i32, %arg1: memref<8x20xf32, #tpu.memory_space<vmem>>, %arg2: memref<20x64xf32, #tpu.memory_space<vmem>>, %arg3: memref<1x64xf32, #tpu.memory_space<vmem>>, %arg4: memref<64x64xf32, #tpu.memory_space<vmem>>, %arg5: memref<1x64xf32, #tpu.memory_space<vmem>>, %arg6: memref<64x128xf32, #tpu.memory_space<vmem>>, %arg7: memref<1x128xf32, #tpu.memory_space<vmem>>, %arg8: memref<8x128xf32, #tpu.memory_space<vmem>>) attributes {dimension_semantics = [#tpu.dimension_semantics<parallel>], iteration_bounds = array<i64: 1>, scalar_prefetch = 0 : i64, scratch_operands = 0 : i64, tpu.core_type = #tpu.core_type<tc>, window_params = [{transform_indices = @transform_0, window_bounds = array<i64: 8, 20>}, {pipeline_mode = #tpu.pipeline_mode<synchronous>, transform_indices = @transform_1, window_bounds = array<i64: 20, 64>}, {pipeline_mode = #tpu.pipeline_mode<synchronous>, transform_indices = @transform_2, window_bounds = array<i64: 1, 64>}, {pipeline_mode = #tpu.pipeline_mode<synchronous>, transform_indices = @transform_3, window_bounds = array<i64: 64, 64>}, {pipeline_mode = #tpu.pipeline_mode<synchronous>, transform_indices = @transform_4, window_bounds = array<i64: 1, 64>}, {pipeline_mode = #tpu.pipeline_mode<synchronous>, transform_indices = @transform_5, window_bounds = array<i64: 64, 128>}, {pipeline_mode = #tpu.pipeline_mode<synchronous>, transform_indices = @transform_6, window_bounds = array<i64: 1, 128>}, {transform_indices = @transform_7, window_bounds = array<i64: 8, 128>}]} {
    %c0 = arith.constant 0 : index
    %c0_0 = arith.constant 0 : index
    %0 = vector.load %arg1[%c0, %c0_0] : memref<8x20xf32, #tpu.memory_space<vmem>>, vector<8x20xf32>
    %c0_1 = arith.constant 0 : index
    %c0_2 = arith.constant 0 : index
    %1 = vector.load %arg2[%c0_1, %c0_2] : memref<20x64xf32, #tpu.memory_space<vmem>>, vector<20x64xf32>
    %cst = arith.constant dense<0.000000e+00> : vector<8x64xf32>
    %2 = tpu.matmul %0, %1, %cst {dimension_numbers = #tpu.dot_dimension_numbers<[1], [0], [0], [1], [0, 0, 1, 1], [], []>} : vector<8x20xf32>, vector<20x64xf32>, vector<8x64xf32> -> vector<8x64xf32>
    %c0_3 = arith.constant 0 : index
    %c0_4 = arith.constant 0 : index
    %3 = vector.load %arg3[%c0_3, %c0_4] : memref<1x64xf32, #tpu.memory_space<vmem>>, vector<1x64xf32>
    %4 = vector.broadcast %3 : vector<1x64xf32> to vector<8x64xf32>
    %5 = arith.addf %2, %4 : vector<8x64xf32>
    %cst_5 = arith.constant 0.000000e+00 : f32
    %6 = vector.broadcast %cst_5 : f32 to vector<8x64xf32>
    %7 = arith.cmpf ogt, %5, %6 : vector<8x64xf32>
    %cst_6 = arith.constant 0.00999999977 : f32
    %8 = vector.broadcast %cst_6 : f32 to vector<8x64xf32>
    %9 = arith.mulf %8, %5 : vector<8x64xf32>
    %10 = arith.select %7, %5, %9 : vector<8x64xi1>, vector<8x64xf32>
    %c0_7 = arith.constant 0 : index
    %c0_8 = arith.constant 0 : index
    %11 = vector.load %arg4[%c0_7, %c0_8] : memref<64x64xf32, #tpu.memory_space<vmem>>, vector<64x64xf32>
    %cst_9 = arith.constant dense<0.000000e+00> : vector<8x64xf32>
    %12 = tpu.matmul %10, %11, %cst_9 {dimension_numbers = #tpu.dot_dimension_numbers<[1], [0], [0], [1], [0, 0, 1, 1], [], []>} : vector<8x64xf32>, vector<64x64xf32>, vector<8x64xf32> -> vector<8x64xf32>
    %c0_10 = arith.constant 0 : index
    %c0_11 = arith.constant 0 : index
    %13 = vector.load %arg5[%c0_10, %c0_11] : memref<1x64xf32, #tpu.memory_space<vmem>>, vector<1x64xf32>
    %14 = vector.broadcast %13 : vector<1x64xf32> to vector<8x64xf32>
    %15 = arith.addf %12, %14 : vector<8x64xf32>
    %cst_12 = arith.constant 0.000000e+00 : f32
    %16 = vector.broadcast %cst_12 : f32 to vector<8x64xf32>
    %17 = arith.cmpf ogt, %15, %16 : vector<8x64xf32>
    %cst_13 = arith.constant 0.00999999977 : f32
    %18 = vector.broadcast %cst_13 : f32 to vector<8x64xf32>
    %19 = arith.mulf %18, %15 : vector<8x64xf32>
    %20 = arith.select %17, %15, %19 : vector<8x64xi1>, vector<8x64xf32>
    %c0_14 = arith.constant 0 : index
    %c0_15 = arith.constant 0 : index
    %21 = vector.load %arg6[%c0_14, %c0_15] : memref<64x128xf32, #tpu.memory_space<vmem>>, vector<64x128xf32>
    %cst_16 = arith.constant dense<0.000000e+00> : vector<8x128xf32>
    %22 = tpu.matmul %20, %21, %cst_16 {dimension_numbers = #tpu.dot_dimension_numbers<[1], [0], [0], [1], [0, 0, 1, 1], [], []>} : vector<8x64xf32>, vector<64x128xf32>, vector<8x128xf32> -> vector<8x128xf32>
    %c0_17 = arith.constant 0 : index
    %c0_18 = arith.constant 0 : index
    %23 = vector.load %arg7[%c0_17, %c0_18] : memref<1x128xf32, #tpu.memory_space<vmem>>, vector<1x128xf32>
    %24 = vector.broadcast %23 : vector<1x128xf32> to vector<8x128xf32>
    %25 = arith.addf %22, %24 : vector<8x128xf32>
    %c0_19 = arith.constant 0 : index
    %c0_20 = arith.constant 0 : index
    %26 = vector.load %arg8[%c0_19, %c0_20] : memref<8x128xf32, #tpu.memory_space<vmem>>, vector<8x128xf32>
    tpu.vector_store %arg8[%c0_19, %c0_20], %25 {strides = array<i32>} : memref<8x128xf32, #tpu.memory_space<vmem>>, vector<8x128xf32>,
    return
  }
  func.func @transform_0(%arg0: i32) -> (i32, i32) {
    %c0_i32 = arith.constant 0 : i32
    %c0_i32_0 = arith.constant 0 : i32
    return %arg0, %c0_i32 : i32, i32
  }
  func.func @transform_1(%arg0: i32) -> (i32, i32) {
    %c0_i32 = arith.constant 0 : i32
    %c0_i32_0 = arith.constant 0 : i32
    %c0_i32_1 = arith.constant 0 : i32
    return %c0_i32, %c0_i32_0 : i32, i32
  }
  func.func @transform_2(%arg0: i32) -> (i32, i32) {
    %c0_i32 = arith.constant 0 : i32
    %c0_i32_0 = arith.constant 0 : i32
    %c0_i32_1 = arith.constant 0 : i32
    return %c0_i32, %c0_i32_0 : i32, i32
  }
  func.func @transform_3(%arg0: i32) -> (i32, i32) {
    %c0_i32 = arith.constant 0 : i32
    %c0_i32_0 = arith.constant 0 : i32
    %c0_i32_1 = arith.constant 0 : i32
    return %c0_i32, %c0_i32_0 : i32, i32
  }
  func.func @transform_4(%arg0: i32) -> (i32, i32) {
    %c0_i32 = arith.constant 0 : i32
    %c0_i32_0 = arith.constant 0 : i32
    %c0_i32_1 = arith.constant 0 : i32
    return %c0_i32, %c0_i32_0 : i32, i32
  }
  func.func @transform_5(%arg0: i32) -> (i32, i32) {
    %c0_i32 = arith.constant 0 : i32
    %c0_i32_0 = arith.constant 0 : i32
    %c0_i32_1 = arith.constant 0 : i32
    return %c0_i32, %c0_i32_0 : i32, i32
  }
  func.func @transform_6(%arg0: i32) -> (i32, i32) {
    %c0_i32 = arith.constant 0 : i32
    %c0_i32_0 = arith.constant 0 : i32
    %c0_i32_1 = arith.constant 0 : i32
    return %c0_i32, %c0_i32_0 : i32, i32
  }
  func.func @transform_7(%arg0: i32) -> (i32, i32) {
    %c0_i32 = arith.constant 0 : i32
    %c0_i32_0 = arith.constant 0 : i32
    return %arg0, %c0_i32 : i32, i32
  }
}

</mosaic_0001>

<llo_original>
// kernel: qnetwork_forward.1
$region0: #{qnetwork_forward.1}
  #allocation0 [shape = 'u32[]', space=smem, size = 0x4, offset = 0x4, fixed_abs, tag = 'smem constant byte address 0x4 - core index']
  #allocation1 [shape = 'u32[144,128]{1,0:T(1,128)}', space=vmem, size = 0x12000, scoped, tag = 'internal scratch']
  %s0 = inlined_call_operand.vmem [shape: f32[8,20], index: 0, kind: input, shape index: {}]
  %s1 = inlined_call_operand.vmem [shape: f32[20,64], index: 1, kind: input, shape index: {}]
  %s2 = inlined_call_operand.vmem [shape: f32[1,64], index: 2, kind: input, shape index: {}]
  %s3 = inlined_call_operand.hbm [shape: f32[64,64], index: 3, kind: input, shape index: {}]
  %s4 = inlined_call_operand.vmem [shape: f32[1,64], index: 4, kind: input, shape index: {}]
  %s5 = inlined_call_operand.hbm [shape: f32[64,128], index: 5, kind: input, shape index: {}]
  %s6 = inlined_call_operand.vmem [shape: f32[1,128], index: 6, kind: input, shape index: {}]
  %s7 = inlined_call_operand.vmem [shape: f32[8,128], index: 7, kind: output, shape index: {}]
  %s8 = sld [smem:[#allocation0]]
  $region46: #{qnetwork_forward.1} parent=0
    _
  %s10 = ssub.s32 1, %s8
  %s11 = scalar_select 0, %s10, %s8
  $region1: #{qnetwork_forward.1} parent=0
    #allocation2 [shape = 'u8[32768]{0}', space=vmem, size = 0x8000, scoped, tag = 'input window, operand 3, single buffered']
    #allocation3 [shape = 's32[1]{0}', space=sflag, size = 0x4, scoped, tag = 'scoped memory for qnetwork_forward.1']
    #allocation4 [shape = 'u8[32768]{0}', space=vmem, size = 0x8000, scoped, tag = 'input window, operand 5, single buffered']
    #allocation5 [shape = 's32[1]{0}', space=sflag, size = 0x4, scoped, tag = 'scoped memory for qnetwork_forward.1']
    %12 = vsyncpa [#allocation3], 0
    %13 = vsyncpa [#allocation5], 0
    // Predicated region
    $region2: #{qnetwork_forward.1} parent=1 // pred_check
      _
    $region3: #{qnetwork_forward.1} parent=1 // pred_check_branch
      %15 = sbr.rel (0) target = $region5
    $region4: #{qnetwork_forward.1} parent=1 // pred_region
      _
    $region5: #{qnetwork_forward.1} parent=1 // pred_fallthru
      _
    // Predicated region
    $region6: #{qnetwork_forward.1} parent=1 // pred_check
      _
    $region7: #{qnetwork_forward.1} parent=1 // pred_check_branch
      %17 = sbr.rel (0) target = $region9
    $region8: #{qnetwork_forward.1} parent=1 // pred_region
      _
    $region9: #{qnetwork_forward.1} parent=1 // pred_fallthru
      _
    // Predicated region
    $region10: #{qnetwork_forward.1} parent=1 // pred_check
      _
    $region11: #{qnetwork_forward.1} parent=1 // pred_check_branch
      %19 = sbr.rel (0) target = $region13
    $region12: #{qnetwork_forward.1} parent=1 // pred_region
      _
    $region13: #{qnetwork_forward.1} parent=1 // pred_fallthru
      _
    // Predicated region
    $region14: #{qnetwork_forward.1} parent=1 // pred_check
      _
    $region15: #{qnetwork_forward.1} parent=1 // pred_check_branch
      %21 = sbr.rel (0) target = $region17
    $region16: #{qnetwork_forward.1} parent=1 // pred_region
      %s23 = ssub.s32 1024, 1024
      %24 = vsyncadd [#allocation3], %s23
      %s25 = sshll.u32 [#allocation2], 4
      %s26 = int_to_ptr.vmem [resolvable:$true] %s25
      %31 = dma.hbm_to_vmem [thread:$0]  %s3, 1024, %s26, [#allocation3], 128, 128, 8
    $region17: #{qnetwork_forward.1} parent=1 // pred_fallthru
      _
    // Predicated region
    $region18: #{qnetwork_forward.1} parent=1 // pred_check
      _
    $region19: #{qnetwork_forward.1} parent=1 // pred_check_branch
      %33 = sbr.rel (0) target = $region21
    $region20: #{qnetwork_forward.1} parent=1 // pred_region
      _
    $region21: #{qnetwork_forward.1} parent=1 // pred_fallthru
      _
    // Predicated region
    $region22: #{qnetwork_forward.1} parent=1 // pred_check
      _
    $region23: #{qnetwork_forward.1} parent=1 // pred_check_branch
      %35 = sbr.rel (0) target = $region25
    $region24: #{qnetwork_forward.1} parent=1 // pred_region
      %s37 = ssub.s32 1024, 1024
      %38 = vsyncadd [#allocation5], %s37
      %s39 = sshll.u32 [#allocation4], 4
      %s40 = int_to_ptr.vmem [resolvable:$true] %s39
      %45 = dma.hbm_to_vmem [thread:$0]  %s5, 1024, %s40, [#allocation5], 128, 128, 8
    $region25: #{qnetwork_forward.1} parent=1 // pred_fallthru
      _
    // Predicated region
    $region26: #{qnetwork_forward.1} parent=1 // pred_check
      _
    $region27: #{qnetwork_forward.1} parent=1 // pred_check_branch
      %47 = sbr.rel (0) target = $region29
    $region28: #{qnetwork_forward.1} parent=1 // pred_region
      _
    $region29: #{qnetwork_forward.1} parent=1 // pred_fallthru
      _
    // Predicated region
    $region30: #{qnetwork_forward.1} parent=1 // pred_check
      _
    $region31: #{qnetwork_forward.1} parent=1 // pred_check_branch
      %49 = sbr.rel (0) target = $region33
    $region32: #{qnetwork_forward.1} parent=1 // pred_region
      %50 = dma.done [#allocation3], 1024
    $region33: #{qnetwork_forward.1} parent=1 // pred_fallthru
      _
    // Predicated region
    $region34: #{qnetwork_forward.1} parent=1 // pred_check
      _
    $region35: #{qnetwork_forward.1} parent=1 // pred_check_branch
      %52 = sbr.rel (0) target = $region37
    $region36: #{qnetwork_forward.1} parent=1 // pred_region
      %53 = dma.done [#allocation5], 1024
    $region37: #{qnetwork_forward.1} parent=1 // pred_fallthru
      _
    %v54 = vld [vmem:[%s0] sm:$0xff]
    %v55 = vld [vmem:[%s1] sm:$0xff]
    %v56 = vld [vmem:[%s1 + $0x8] sm:$0xff]
    %v57 = vld [vmem:[%s1 + $0x10] sm:$0xf]
    %v58 = vld [vmem:[%s2] sm:$0x1]
    %v60 = vlaneseq
    %v61 = vshrl.u32 %v60, 7
    %v62 = vsub.s32 0, %v61
    %v63 = vrot.slane %v58, %v62
    %vm65 = vcmask 162816
    %v67 = vsel %vm65, %v54, 0
    %vm69 = vcmask 1043456
    %v71 = vsel %vm69, %v57, 0
    %73 = vmatprep.subr.mxu0 0.0
    %74 = vmatpush1.msra.mxu0 0.0
    %75 = vmatprep.subr.mxu0 0.0
    %76 = vmatpush1.msra.mxu0 0.0
    %77 = vmatprep.subr.mxu0 0.0
    %78 = vmatpush1.msra.mxu0 0.0
    %79 = vmatprep.subr.mxu0 0.0
    %80 = vmatpush1.msra.mxu0 0.0
    %81 = vmatprep.subr.mxu0 0.0
    %82 = vmatpush1.msra.mxu0 0.0
    %83 = vmatprep.subr.mxu0 0.0
    %84 = vmatpush1.msra.mxu0 0.0
    %85 = vmatprep.subr.mxu0 0.0
    %86 = vmatpush1.msra.mxu0 0.0
    %87 = vmatprep.subr.mxu0 0.0
    %88 = vmatpush1.msra.mxu0 0.0
    %89 = vmatprep.subr.mxu0 0.0
    %90 = vmatpush1.msra.mxu0 0.0
    %91 = vmatprep.subr.mxu0 0.0
    %92 = vmatpush1.msra.mxu0 0.0
    %93 = vmatprep.subr.mxu0 0.0
    %94 = vmatpush1.msra.mxu0 0.0
    %95 = vmatprep.subr.mxu0 0.0
    %96 = vmatpush1.msra.mxu0 0.0
    %97 = vmatprep.subr.mxu0 0.0
    %98 = vmatpush1.msra.mxu0 0.0
    %99 = vmatprep.subr.mxu0 0.0
    %100 = vmatpush1.msra.mxu0 %v71
    %101 = vmatprep.subr.mxu0 0.0
    %102 = vmatpush1.msra.mxu0 %v56
    %103 = vmatprep.subr.mxu0 0.0
    %104 = vmatpush1.msra.mxu0 %v55
    %105 = vmatprep.subr.mxu0 0.0
    %106 = vmatpush2.msra.mxu0 0.0
    %107 = vmatprep.subr.mxu0 0.0
    %108 = vmatpush2.msra.mxu0 0.0
    %109 = vmatprep.subr.mxu0 0.0
    %110 = vmatpush2.msra.mxu0 0.0
    %111 = vmatprep.subr.mxu0 0.0
    %112 = vmatpush2.msra.mxu0 0.0
    %113 = vmatprep.subr.mxu0 0.0
    %114 = vmatpush2.msra.mxu0 0.0
    %115 = vmatprep.subr.mxu0 0.0
    %116 = vmatpush2.msra.mxu0 0.0
    %117 = vmatprep.subr.mxu0 0.0
    %118 = vmatpush2.msra.mxu0 0.0
    %119 = vmatprep.subr.mxu0 0.0
    %120 = vmatpush2.msra.mxu0 0.0
    %121 = vmatprep.subr.mxu0 0.0
    %122 = vmatpush2.msra.mxu0 0.0
    %123 = vmatprep.subr.mxu0 0.0
    %124 = vmatpush2.msra.mxu0 0.0
    %125 = vmatprep.subr.mxu0 0.0
    %126 = vmatpush2.msra.mxu0 0.0
    %127 = vmatprep.subr.mxu0 0.0
    %128 = vmatpush2.msra.mxu0 0.0
    %129 = vmatprep.subr.mxu0 0.0
    %130 = vmatpush2.msra.mxu0 0.0
    %131 = vmatprep.subr.mxu0 0.0
    %132 = vmatpush2.msra.mxu0 0.0
    %133 = vmatprep.subr.mxu0 0.0
    %134 = vmatpush2.msra.mxu0 0.0
    %135 = vmatprep.subr.mxu0 0.0
    %136 = vmatpush2.msra.mxu0 0.0
    %137 = vmatprep.mubr.f32.mxu0 0.0
    %138 = vmatmul.mubr.f32.gmra.mxu0 %v67
    %v139 = vpop.f32.mrf.mxu0
    %v140 = vadd.f32 %v63, %v139
    %v141 = vpop.f32.mrf.mxu0
    %142 = vdwg.mxu0
    %vm143 = vcmp.gt.f32.partialorder %v140, 0.0
    %v144 = vmul.f32 %v140, 0.01
    %v145 = vsel %vm143, %v140, %v144
    %v146 = vld [vmem:[#allocation2] sm:$0xff]
    %v147 = vld [vmem:[#allocation2 + $0x8] sm:$0xff]
    %v148 = vld [vmem:[#allocation2 + $0x10] sm:$0xff]
    %v149 = vld [vmem:[#allocation2 + $0x18] sm:$0xff]
    %v150 = vld [vmem:[#allocation2 + $0x20] sm:$0xff]
    %v151 = vld [vmem:[#allocation2 + $0x28] sm:$0xff]
    %v152 = vld [vmem:[#allocation2 + $0x30] sm:$0xff]
    %v153 = vld [vmem:[#allocation2 + $0x38] sm:$0xff]
    %v154 = vld [vmem:[%s4] sm:$0x1]
    %v156 = vlaneseq
    %v157 = vshrl.u32 %v156, 7
    %v158 = vsub.s32 0, %v157
    %v159 = vrot.slane %v154, %v158
    %vm161 = vcmask 523264
    %v163 = vsel %vm161, %v145, 0
    %165 = vmatprep.subr.mxu0 0.0
    %166 = vmatpush1.msra.mxu0 0.0
    %167 = vmatprep.subr.mxu0 0.0
    %168 = vmatpush1.msra.mxu0 0.0
    %169 = vmatprep.subr.mxu0 0.0
    %170 = vmatpush1.msra.mxu0 0.0
    %171 = vmatprep.subr.mxu0 0.0
    %172 = vmatpush1.msra.mxu0 0.0
    %173 = vmatprep.subr.mxu0 0.0
    %174 = vmatpush1.msra.mxu0 0.0
    %175 = vmatprep.subr.mxu0 0.0
    %176 = vmatpush1.msra.mxu0 0.0
    %177 = vmatprep.subr.mxu0 0.0
    %178 = vmatpush1.msra.mxu0 0.0
    %179 = vmatprep.subr.mxu0 0.0
    %180 = vmatpush1.msra.mxu0 0.0
    %181 = vmatprep.subr.mxu0 0.0
    %182 = vmatpush1.msra.mxu0 %v153
    %183 = vmatprep.subr.mxu0 0.0
    %184 = vmatpush1.msra.mxu0 %v152
    %185 = vmatprep.subr.mxu0 0.0
    %186 = vmatpush1.msra.mxu0 %v151
    %187 = vmatprep.subr.mxu0 0.0
    %188 = vmatpush1.msra.mxu0 %v150
    %189 = vmatprep.subr.mxu0 0.0
    %190 = vmatpush1.msra.mxu0 %v149
    %191 = vmatprep.subr.mxu0 0.0
    %192 = vmatpush1.msra.mxu0 %v148
    %193 = vmatprep.subr.mxu0 0.0
    %194 = vmatpush1.msra.mxu0 %v147
    %195 = vmatprep.subr.mxu0 0.0
    %196 = vmatpush1.msra.mxu0 %v146
    %197 = vmatprep.subr.mxu0 0.0
    %198 = vmatpush2.msra.mxu0 0.0
    %199 = vmatprep.subr.mxu0 0.0
    %200 = vmatpush2.msra.mxu0 0.0
    %201 = vmatprep.subr.mxu0 0.0
    %202 = vmatpush2.msra.mxu0 0.0
    %203 = vmatprep.subr.mxu0 0.0
    %204 = vmatpush2.msra.mxu0 0.0
    %205 = vmatprep.subr.mxu0 0.0
    %206 = vmatpush2.msra.mxu0 0.0
    %207 = vmatprep.subr.mxu0 0.0
    %208 = vmatpush2.msra.mxu0 0.0
    %209 = vmatprep.subr.mxu0 0.0
    %210 = vmatpush2.msra.mxu0 0.0
    %211 = vmatprep.subr.mxu0 0.0
    %212 = vmatpush2.msra.mxu0 0.0
    %213 = vmatprep.subr.mxu0 0.0
    %214 = vmatpush2.msra.mxu0 0.0
    %215 = vmatprep.subr.mxu0 0.0
    %216 = vmatpush2.msra.mxu0 0.0
    %217 = vmatprep.subr.mxu0 0.0
    %218 = vmatpush2.msra.mxu0 0.0
    %219 = vmatprep.subr.mxu0 0.0
    %220 = vmatpush2.msra.mxu0 0.0
    %221 = vmatprep.subr.mxu0 0.0
    %222 = vmatpush2.msra.mxu0 0.0
    %223 = vmatprep.subr.mxu0 0.0
    %224 = vmatpush2.msra.mxu0 0.0
    %225 = vmatprep.subr.mxu0 0.0
    %226 = vmatpush2.msra.mxu0 0.0
    %227 = vmatprep.subr.mxu0 0.0
    %228 = vmatpush2.msra.mxu0 0.0
    %229 = vmatprep.mubr.f32.mxu0 0.0
    %230 = vmatmul.mubr.f32.gmra.mxu0 %v163
    %v231 = vpop.f32.mrf.mxu0
    %v232 = vadd.f32 %v159, %v231
    %v233 = vpop.f32.mrf.mxu0
    %234 = vdwg.mxu0
    %vm235 = vcmp.gt.f32.partialorder %v232, 0.0
    %v236 = vmul.f32 %v232, 0.01
    %v237 = vsel %vm235, %v232, %v236
    %v238 = vld [vmem:[#allocation4] sm:$0xff]
    %v239 = vld [vmem:[#allocation4 + $0x8] sm:$0xff]
    %v240 = vld [vmem:[#allocation4 + $0x10] sm:$0xff]
    %v241 = vld [vmem:[#allocation4 + $0x18] sm:$0xff]
    %v242 = vld [vmem:[#allocation4 + $0x20] sm:$0xff]
    %v243 = vld [vmem:[#allocation4 + $0x28] sm:$0xff]
    %v244 = vld [vmem:[#allocation4 + $0x30] sm:$0xff]
    %v245 = vld [vmem:[#allocation4 + $0x38] sm:$0xff]
    %v246 = vld [vmem:[%s6] sm:$0x1]
    %v248 = vlaneseq
    %v249 = vshrl.u32 %v248, 7
    %v250 = vsub.s32 0, %v249
    %v251 = vrot.slane %v246, %v250
    %v254 = vsel %vm161, %v237, 0
    %256 = vmatprep.subr.mxu0 0.0
    %257 = vmatpush1.msra.mxu0 0.0
    %258 = vmatprep.subr.mxu0 0.0
    %259 = vmatpush1.msra.mxu0 0.0
    %260 = vmatprep.subr.mxu0 0.0
    %261 = vmatpush1.msra.mxu0 0.0
    %262 = vmatprep.subr.mxu0 0.0
    %263 = vmatpush1.msra.mxu0 0.0
    %264 = vmatprep.subr.mxu0 0.0
    %265 = vmatpush1.msra.mxu0 0.0
    %266 = vmatprep.subr.mxu0 0.0
    %267 = vmatpush1.msra.mxu0 0.0
    %268 = vmatprep.subr.mxu0 0.0
    %269 = vmatpush1.msra.mxu0 0.0
    %270 = vmatprep.subr.mxu0 0.0
    %271 = vmatpush1.msra.mxu0 0.0
    %272 = vmatprep.subr.mxu0 0.0
    %273 = vmatpush1.msra.mxu0 %v245
    %274 = vmatprep.subr.mxu0 0.0
    %275 = vmatpush1.msra.mxu0 %v244
    %276 = vmatprep.subr.mxu0 0.0
    %277 = vmatpush1.msra.mxu0 %v243
    %278 = vmatprep.subr.mxu0 0.0
    %279 = vmatpush1.msra.mxu0 %v242
    %280 = vmatprep.subr.mxu0 0.0
    %281 = vmatpush1.msra.mxu0 %v241
    %282 = vmatprep.subr.mxu0 0.0
    %283 = vmatpush1.msra.mxu0 %v240
    %284 = vmatprep.subr.mxu0 0.0
    %285 = vmatpush1.msra.mxu0 %v239
    %286 = vmatprep.subr.mxu0 0.0
    %287 = vmatpush1.msra.mxu0 %v238
    %288 = vmatprep.subr.mxu0 0.0
    %289 = vmatpush2.msra.mxu0 0.0
    %290 = vmatprep.subr.mxu0 0.0
    %291 = vmatpush2.msra.mxu0 0.0
    %292 = vmatprep.subr.mxu0 0.0
    %293 = vmatpush2.msra.mxu0 0.0
    %294 = vmatprep.subr.mxu0 0.0
    %295 = vmatpush2.msra.mxu0 0.0
    %296 = vmatprep.subr.mxu0 0.0
    %297 = vmatpush2.msra.mxu0 0.0
    %298 = vmatprep.subr.mxu0 0.0
    %299 = vmatpush2.msra.mxu0 0.0
    %300 = vmatprep.subr.mxu0 0.0
    %301 = vmatpush2.msra.mxu0 0.0
    %302 = vmatprep.subr.mxu0 0.0
    %303 = vmatpush2.msra.mxu0 0.0
    %304 = vmatprep.subr.mxu0 0.0
    %305 = vmatpush2.msra.mxu0 0.0
    %306 = vmatprep.subr.mxu0 0.0
    %307 = vmatpush2.msra.mxu0 0.0
    %308 = vmatprep.subr.mxu0 0.0
    %309 = vmatpush2.msra.mxu0 0.0
    %310 = vmatprep.subr.mxu0 0.0
    %311 = vmatpush2.msra.mxu0 0.0
    %312 = vmatprep.subr.mxu0 0.0
    %313 = vmatpush2.msra.mxu0 0.0
    %314 = vmatprep.subr.mxu0 0.0
    %315 = vmatpush2.msra.mxu0 0.0
    %316 = vmatprep.subr.mxu0 0.0
    %317 = vmatpush2.msra.mxu0 0.0
    %318 = vmatprep.subr.mxu0 0.0
    %319 = vmatpush2.msra.mxu0 0.0
    %320 = vmatprep.mubr.f32.mxu0 0.0
    %321 = vmatmul.mubr.f32.gmra.mxu0 %v254
    %v322 = vpop.f32.mrf.mxu0
    %v323 = vadd.f32 %v251, %v322
    %v324 = vpop.f32.mrf.mxu0
    %325 = vdwg.mxu0
    %326 = vst [vmem:[%s7] sm:$0xff] %v323
    // Predicated region
    $region38: #{qnetwork_forward.1} parent=1 // pred_check
      _
    $region39: #{qnetwork_forward.1} parent=1 // pred_check_branch
      %328 = sbr.rel (0) target = $region41
    $region40: #{qnetwork_forward.1} parent=1 // pred_region
      _
    $region41: #{qnetwork_forward.1} parent=1 // pred_fallthru
      _
    // Predicated region
    $region42: #{qnetwork_forward.1} parent=1 // pred_check
      _
    $region43: #{qnetwork_forward.1} parent=1 // pred_check_branch
      %330 = sbr.rel (0) target = $region45
    $region44: #{qnetwork_forward.1} parent=1 // pred_region
      _
    $region45: #{qnetwork_forward.1} parent=1 // pred_fallthru
      _
    %331 = vsyncpa [#allocation3], 1
    %332 = vsyncpa [#allocation5], 1

</llo_original>
